<compile_context>
chip_gen: v6e
topology: v6e:2x2x1
jax: 0.10.0
libtpu: 0.0.40
codegen_flags: <defaults>
</compile_context>

<pallas_src>
import functools

import jax
import jax.numpy as jnp
from jax.experimental import pallas as pl
from jax.experimental.pallas import tpu as pltpu


def _round_up(x, m):
    return ((x + m - 1) // m) * m


def _encoder_kernel(x_ref, w1_ref, b1_ref, wh_ref, bh_ref,
                    zloc_ref, zscale_ref, *, z_dim):
    # x_ref:     (TILE_B, in_shape)     incoming dtype (f32 here)
    # w1_ref:    (in_shape, hidden_1)   bf16   (resident across grid)
    # b1_ref:    (1, hidden_1)          f32
    # wh_ref:    (hidden_1, 2*z_dim)    bf16   (fused fc21|fc22 weights)
    # bh_ref:    (1, 2*z_dim)           f32
    # zloc_ref:  (TILE_B, z_dim)        f32
    # zscale_ref:(TILE_B, z_dim)        f32

    # Per-tile cast to bf16 (avoids a separate whole-batch cast pass in HBM).
    x = x_ref[...].astype(jnp.bfloat16)

    # hidden = relu(x @ W1 + b1)   -- bf16 MXU inputs, f32 accumulate/elementwise
    h = jnp.dot(x, w1_ref[...], preferred_element_type=jnp.float32)
    h = jnp.maximum(h + b1_ref[...], 0.0)

    # Fused heads: pre = hidden @ [W21 | W22] + [b21 | b22]
    pre = jnp.dot(h.astype(wh_ref.dtype), wh_ref[...],
                  preferred_element_type=jnp.float32) + bh_ref[...]

    zloc_ref[...] = pre[:, :z_dim]
    zscale_ref[...] = jnp.logaddexp(pre[:, z_dim:], 0.0) + 0.01   # stable softplus
    # TODO(synk): the PyTorch `if torch.isnan(z_loc[0][0]): z = 2` branch has no
    # effect on the returned values, so it is intentionally omitted.


def prepare_encoder_params(params):
    """One-time head fusion + weight casts, hoisted off the per-call path."""
    w1, b1, w21, b21, w22, b22 = params
    w_heads = jnp.concatenate([w21, w22], axis=1)        # (hidden_1, 2*z_dim)
    b_heads = jnp.concatenate([b21, b22], axis=1)        # (1, 2*z_dim)
    return (w1.astype(jnp.bfloat16), b1.astype(jnp.float32),
            w_heads.astype(jnp.bfloat16), b_heads.astype(jnp.float32))


def _pick_tile(B, tile_b):
    # Large tiles amortize the ~0.35 us per-grid-step overhead, but keep >=2
    # grid steps whenever B allows so the "parallel" batch axis shards across
    # both TensorCores on v7x.  Tiles are always a multiple of 8 sublanes.
    tb = min(tile_b, _round_up(B, 8))
    if B > 16:
        tb = min(tb, _round_up(pl.cdiv(B, 2), 8))
    return max(tb, 8)


def encoder_forward(x, prepared_params, *, tile_b=8192):
    """x: any shape whose trailing dims flatten to in_shape. Returns (z_loc, z_scale)."""
    w1b, b1f, whb, bhf = prepared_params
    in_shape, hidden_1 = w1b.shape
    two_z = whb.shape[1]
    z_dim = two_z // 2

    x2d = x.reshape(-1, in_shape)                        # x.view(-1, in_shape)
    B = x2d.shape[0]

    tb = _pick_tile(B, tile_b)
    grid = (pl.cdiv(B, tb),)                             # ragged last block handled by Pallas

    kernel = functools.partial(_encoder_kernel, z_dim=z_dim)
    z_loc, z_scale = pl.pallas_call(
        kernel,
        out_shape=(jax.ShapeDtypeStruct((B, z_dim), jnp.float32),
                   jax.ShapeDtypeStruct((B, z_dim), jnp.float32)),
        grid=grid,
        in_specs=[
            pl.BlockSpec((tb, in_shape), lambda i: (i, 0)),          # streamed X (orig dtype)
            pl.BlockSpec((in_shape, hidden_1), lambda i: (0, 0)),    # resident W1
            pl.BlockSpec((1, hidden_1), lambda i: (0, 0)),           # resident b1
            pl.BlockSpec((hidden_1, two_z), lambda i: (0, 0)),       # resident [W21|W22]
            pl.BlockSpec((1, two_z), lambda i: (0, 0)),              # resident [b21|b22]
        ],
        out_specs=(pl.BlockSpec((tb, z_dim), lambda i: (i, 0)),
                   pl.BlockSpec((tb, z_dim), lambda i: (i, 0))),
        compiler_params=pltpu.CompilerParams(
            dimension_semantics=("parallel",)),
    )(x2d, w1b, b1f, whb, bhf)
    return z_loc, z_scale


def init_encoder_params(key, in_shape, hidden_1, z_dim):
    """Deterministic init mimicking nn.Linear (uniform +-1/sqrt(fan_in)).

    Weights stored transposed vs PyTorch: (in_features, out_features).
    Biases kept 2-D (1, out_features) for clean TPU broadcasting.
    """
    k1, k2, k3, k4, k5, k6 = jax.random.split(key, 6)

    def lin(kw, kb, fan_in, fan_out):
        bound = 1.0 / jnp.sqrt(jnp.float32(fan_in))
        w = jax.random.uniform(kw, (fan_in, fan_out), jnp.float32, -bound, bound)
        b = jax.random.uniform(kb, (1, fan_out), jnp.float32, -bound, bound)
        return w, b

    w1, b1 = lin(k1, k2, in_shape, hidden_1)
    w21, b21 = lin(k3, k4, hidden_1, z_dim)
    w22, b22 = lin(k5, k6, hidden_1, z_dim)
    return (w1, b1, w21, b21, w22, b22)


if __name__ == "__main__":
    # Small shapes: in_shape=32, hidden_1=64, z_dim=16; x is (2, 4, 32) -> view(-1, 32) = (8, 32)
    in_shape, hidden_1, z_dim = 32, 64, 16

    key = jax.random.PRNGKey(0)
    kx, kp = jax.random.split(key)
    x = jax.random.normal(kx, (2, 4, in_shape), dtype=jnp.float32)
    params = init_encoder_params(kp, in_shape, hidden_1, z_dim)
    prepared = prepare_encoder_params(params)

    fwd = jax.jit(encoder_forward)   # keeps reshape/kernel under one jit
    z_loc, z_scale = fwd(x, prepared)
    jax.block_until_ready((z_loc, z_scale))

    # Reference in plain JAX following the same bf16-matmul / f32-accumulate path.
    w1, b1, w21, b21, w22, b22 = params
    x2d = x.reshape(-1, in_shape)
    xb = x2d.astype(jnp.bfloat16)
    h_ref = jnp.maximum(
        jnp.dot(xb, w1.astype(jnp.bfloat16),
                preferred_element_type=jnp.float32) + b1, 0.0)
    hb = h_ref.astype(jnp.bfloat16)
    zloc_ref = jnp.dot(hb, w21.astype(jnp.bfloat16),
                       preferred_element_type=jnp.float32) + b21
    zscale_ref = jax.nn.softplus(
        jnp.dot(hb, w22.astype(jnp.bfloat16),
                preferred_element_type=jnp.float32) + b22) + 0.01

    assert z_loc.shape == (8, z_dim) and z_scale.shape == (8, z_dim)
    assert jnp.allclose(z_loc, zloc_ref, atol=2e-3, rtol=2e-3), "z_loc mismatch"
    assert jnp.allclose(z_scale, zscale_ref, atol=2e-3, rtol=2e-3), "z_scale mismatch"

    print("KERNEL_OK")
</pallas_src>

<mosaic_0001>
module attributes {stable_mosaic.version = 11 : i64} {
  func.func @_encoder_kernel(%arg0: i32, %arg1: memref<8x32xf32, #tpu.memory_space<vmem>>, %arg2: memref<32x64xbf16, #tpu.memory_space<vmem>>, %arg3: memref<1x64xf32, #tpu.memory_space<vmem>>, %arg4: memref<64x32xbf16, #tpu.memory_space<vmem>>, %arg5: memref<1x32xf32, #tpu.memory_space<vmem>>, %arg6: memref<8x16xf32, #tpu.memory_space<vmem>>, %arg7: memref<8x16xf32, #tpu.memory_space<vmem>>) attributes {dimension_semantics = [#tpu.dimension_semantics<parallel>], iteration_bounds = array<i64: 1>, scalar_prefetch = 0 : i64, scratch_operands = 0 : i64, tpu.core_type = #tpu.core_type<tc>, window_params = [{transform_indices = @transform_0, window_bounds = array<i64: 8, 32>}, {pipeline_mode = #tpu.pipeline_mode<synchronous>, transform_indices = @transform_1, window_bounds = array<i64: 32, 64>}, {pipeline_mode = #tpu.pipeline_mode<synchronous>, transform_indices = @transform_2, window_bounds = array<i64: 1, 64>}, {pipeline_mode = #tpu.pipeline_mode<synchronous>, transform_indices = @transform_3, window_bounds = array<i64: 64, 32>}, {pipeline_mode = #tpu.pipeline_mode<synchronous>, transform_indices = @transform_4, window_bounds = array<i64: 1, 32>}, {transform_indices = @transform_5, window_bounds = array<i64: 8, 16>}, {transform_indices = @transform_6, window_bounds = array<i64: 8, 16>}]} {
    %c0 = arith.constant 0 : index
    %c0_0 = arith.constant 0 : index
    %0 = vector.load %arg1[%c0, %c0_0] : memref<8x32xf32, #tpu.memory_space<vmem>>, vector<8x32xf32>
    %1 = arith.truncf %0 : vector<8x32xf32> to vector<8x32xbf16>
    %c0_1 = arith.constant 0 : index
    %c0_2 = arith.constant 0 : index
    %2 = vector.load %arg2[%c0_1, %c0_2] : memref<32x64xbf16, #tpu.memory_space<vmem>>, vector<32x64xbf16>
    %cst = arith.constant dense<0.000000e+00> : vector<8x64xf32>
    %3 = tpu.matmul %1, %2, %cst {dimension_numbers = #tpu.dot_dimension_numbers<[1], [0], [0], [1], [0, 0, 1, 1], [], []>} : vector<8x32xbf16>, vector<32x64xbf16>, vector<8x64xf32> -> vector<8x64xf32>
    %c0_3 = arith.constant 0 : index
    %c0_4 = arith.constant 0 : index
    %4 = vector.load %arg3[%c0_3, %c0_4] : memref<1x64xf32, #tpu.memory_space<vmem>>, vector<1x64xf32>
    %5 = vector.broadcast %4 : vector<1x64xf32> to vector<8x64xf32>
    %6 = arith.addf %3, %5 : vector<8x64xf32>
    %cst_5 = arith.constant 0.000000e+00 : f32
    %7 = vector.broadcast %cst_5 : f32 to vector<8x64xf32>
    %8 = arith.maximumf %6, %7 : vector<8x64xf32>
    %9 = arith.truncf %8 : vector<8x64xf32> to vector<8x64xbf16>
    %c0_6 = arith.constant 0 : index
    %c0_7 = arith.constant 0 : index
    %10 = vector.load %arg4[%c0_6, %c0_7] : memref<64x32xbf16, #tpu.memory_space<vmem>>, vector<64x32xbf16>
    %cst_8 = arith.constant dense<0.000000e+00> : vector<8x32xf32>
    %11 = tpu.matmul %9, %10, %cst_8 {dimension_numbers = #tpu.dot_dimension_numbers<[1], [0], [0], [1], [0, 0, 1, 1], [], []>} : vector<8x64xbf16>, vector<64x32xbf16>, vector<8x32xf32> -> vector<8x32xf32>
    %c0_9 = arith.constant 0 : index
    %c0_10 = arith.constant 0 : index
    %12 = vector.load %arg5[%c0_9, %c0_10] : memref<1x32xf32, #tpu.memory_space<vmem>>, vector<1x32xf32>
    %13 = vector.broadcast %12 : vector<1x32xf32> to vector<8x32xf32>
    %14 = arith.addf %11, %13 : vector<8x32xf32>
    %15 = vector.extract_strided_slice %14 {offsets = [0, 0], sizes = [8, 16], strides = [1, 1]} : vector<8x32xf32> to vector<8x16xf32>
    %c0_11 = arith.constant 0 : index
    %c0_12 = arith.constant 0 : index
    %16 = vector.load %arg6[%c0_11, %c0_12] : memref<8x16xf32, #tpu.memory_space<vmem>>, vector<8x16xf32>
    tpu.vector_store %arg6[%c0_11, %c0_12], %15 {strides = array<i32>} : memref<8x16xf32, #tpu.memory_space<vmem>>, vector<8x16xf32>,
    %17 = vector.extract_strided_slice %14 {offsets = [0, 16], sizes = [8, 16], strides = [1, 1]} : vector<8x32xf32> to vector<8x16xf32>
    %cst_13 = arith.constant 0.000000e+00 : f32
    %18 = vector.broadcast %cst_13 : f32 to vector<8x16xf32>
    %19 = arith.maximumf %17, %18 : vector<8x16xf32>
    %20 = vector.broadcast %cst_13 : f32 to vector<8x16xf32>
    %21 = arith.subf %17, %20 : vector<8x16xf32>
    %22 = arith.cmpf one, %21, %21 : vector<8x16xf32>
    %23 = vector.broadcast %cst_13 : f32 to vector<8x16xf32>
    %24 = arith.addf %17, %23 : vector<8x16xf32>
    %25 = math.absf %21 : vector<8x16xf32>
    %cst_14 = arith.constant 0.000000e+00 : f32
    %26 = vector.broadcast %cst_14 : f32 to vector<8x16xf32>
    %27 = arith.subf %26, %25 : vector<8x16xf32>
    %28 = math.exp %27 : vector<8x16xf32>
    %29 = math.log1p %28 : vector<8x16xf32>
    %30 = arith.addf %19, %29 : vector<8x16xf32>
    %31 = arith.select %22, %24, %30 : vector<8x16xi1>, vector<8x16xf32>
    %cst_15 = arith.constant 0.00999999977 : f32
    %32 = vector.broadcast %cst_15 : f32 to vector<8x16xf32>
    %33 = arith.addf %31, %32 : vector<8x16xf32>
    %c0_16 = arith.constant 0 : index
    %c0_17 = arith.constant 0 : index
    %34 = vector.load %arg7[%c0_16, %c0_17] : memref<8x16xf32, #tpu.memory_space<vmem>>, vector<8x16xf32>
    tpu.vector_store %arg7[%c0_16, %c0_17], %33 {strides = array<i32>} : memref<8x16xf32, #tpu.memory_space<vmem>>, vector<8x16xf32>,
    return
  }
  func.func @transform_0(%arg0: i32) -> (i32, i32) {
    %c0_i32 = arith.constant 0 : i32
    %c0_i32_0 = arith.constant 0 : i32
    return %arg0, %c0_i32 : i32, i32
  }
  func.func @transform_1(%arg0: i32) -> (i32, i32) {
    %c0_i32 = arith.constant 0 : i32
    %c0_i32_0 = arith.constant 0 : i32
    %c0_i32_1 = arith.constant 0 : i32
    return %c0_i32, %c0_i32_0 : i32, i32
  }
  func.func @transform_2(%arg0: i32) -> (i32, i32) {
    %c0_i32 = arith.constant 0 : i32
    %c0_i32_0 = arith.constant 0 : i32
    %c0_i32_1 = arith.constant 0 : i32
    return %c0_i32, %c0_i32_0 : i32, i32
  }
  func.func @transform_3(%arg0: i32) -> (i32, i32) {
    %c0_i32 = arith.constant 0 : i32
    %c0_i32_0 = arith.constant 0 : i32
    %c0_i32_1 = arith.constant 0 : i32
    return %c0_i32, %c0_i32_0 : i32, i32
  }
  func.func @transform_4(%arg0: i32) -> (i32, i32) {
    %c0_i32 = arith.constant 0 : i32
    %c0_i32_0 = arith.constant 0 : i32
    %c0_i32_1 = arith.constant 0 : i32
    return %c0_i32, %c0_i32_0 : i32, i32
  }
  func.func @transform_5(%arg0: i32) -> (i32, i32) {
    %c0_i32 = arith.constant 0 : i32
    %c0_i32_0 = arith.constant 0 : i32
    return %arg0, %c0_i32 : i32, i32
  }
  func.func @transform_6(%arg0: i32) -> (i32, i32) {
    %c0_i32 = arith.constant 0 : i32
    %c0_i32_0 = arith.constant 0 : i32
    return %arg0, %c0_i32 : i32, i32
  }
}

</mosaic_0001>

<llo_original>
// kernel: encoder_forward.1
$region0: #{encoder_forward.1}
  #allocation0 [shape = 'u32[]', space=smem, size = 0x4, offset = 0x4, fixed_abs, tag = 'smem constant byte address 0x4 - core index']
  #allocation1 [shape = 'u32[144,128]{1,0:T(1,128)}', space=vmem, size = 0x12000, scoped, tag = 'internal scratch']
  %s0 = inlined_call_operand.vmem [shape: f32[8,32], index: 0, kind: input, shape index: {}]
  %s1 = inlined_call_operand.vmem [shape: bf16[32,64], index: 1, kind: input, shape index: {}]
  %s2 = inlined_call_operand.vmem [shape: f32[1,64], index: 2, kind: input, shape index: {}]
  %s3 = inlined_call_operand.vmem [shape: bf16[64,32], index: 3, kind: input, shape index: {}]
  %s4 = inlined_call_operand.vmem [shape: f32[1,32], index: 4, kind: input, shape index: {}]
  %s5 = inlined_call_operand.hbm [shape: f32[8,16], index: 5, kind: output, shape index: {0}]
  %s6 = inlined_call_operand.hbm [shape: f32[8,16], index: 6, kind: output, shape index: {1}]
  %7 = xla_tuple %s5, %s6
  %s8 = sld [smem:[#allocation0]]
  $region38: #{encoder_forward.1} parent=0
    _
  %s10 = ssub.s32 1, %s8
  %s11 = scalar_select 0, %s10, %s8
  $region1: #{encoder_forward.1} parent=0
    #allocation2 [shape = 'u8[4096]{0}', space=vmem, size = 0x1000, scoped, tag = 'output window, operand 0, single buffered']
    #allocation3 [shape = 's32[1]{0}', space=sflag, size = 0x4, scoped, tag = 'scoped memory for encoder_forward.1']
    #allocation4 [shape = 'u8[4096]{0}', space=vmem, size = 0x1000, scoped, tag = 'output window, operand 1, single buffered']
    #allocation5 [shape = 's32[1]{0}', space=sflag, size = 0x4, scoped, tag = 'scoped memory for encoder_forward.1']
    %12 = vsyncpa [#allocation3], 0
    %13 = vsyncpa [#allocation5], 0
    // Predicated region
    $region2: #{encoder_forward.1} parent=1 // pred_check
      _
    $region3: #{encoder_forward.1} parent=1 // pred_check_branch
      %15 = sbr.rel (0) target = $region5
    $region4: #{encoder_forward.1} parent=1 // pred_region
      _
    $region5: #{encoder_forward.1} parent=1 // pred_fallthru
      _
    // Predicated region
    $region6: #{encoder_forward.1} parent=1 // pred_check
      _
    $region7: #{encoder_forward.1} parent=1 // pred_check_branch
      %17 = sbr.rel (0) target = $region9
    $region8: #{encoder_forward.1} parent=1 // pred_region
      _
    $region9: #{encoder_forward.1} parent=1 // pred_fallthru
      _
    // Predicated region
    $region10: #{encoder_forward.1} parent=1 // pred_check
      _
    $region11: #{encoder_forward.1} parent=1 // pred_check_branch
      %19 = sbr.rel (0) target = $region13
    $region12: #{encoder_forward.1} parent=1 // pred_region
      _
    $region13: #{encoder_forward.1} parent=1 // pred_fallthru
      _
    // Predicated region
    $region14: #{encoder_forward.1} parent=1 // pred_check
      _
    $region15: #{encoder_forward.1} parent=1 // pred_check_branch
      %21 = sbr.rel (0) target = $region17
    $region16: #{encoder_forward.1} parent=1 // pred_region
      _
    $region17: #{encoder_forward.1} parent=1 // pred_fallthru
      _
    // Predicated region
    $region18: #{encoder_forward.1} parent=1 // pred_check
      _
    $region19: #{encoder_forward.1} parent=1 // pred_check_branch
      %23 = sbr.rel (0) target = $region21
    $region20: #{encoder_forward.1} parent=1 // pred_region
      _
    $region21: #{encoder_forward.1} parent=1 // pred_fallthru
      _
    %v25 = vld [vmem:[%s0] sm:$0xff]
    %v26 = vpack.c.bf16 %v25, %v25
    %v27 = vld [vmem:[%s1] sm:$0xf]
    %v28 = vld [vmem:[%s1 + $0x4] sm:$0xf]
    %v29 = vld [vmem:[%s1 + $0x8] sm:$0xf]
    %v30 = vld [vmem:[%s1 + $0xc] sm:$0xf]
    %v31 = vld [vmem:[%s2] sm:$0x1]
    %v33 = vlaneseq
    %v34 = vshrl.u32 %v33, 7
    %v35 = vsub.s32 0, %v34
    %v36 = vrot.slane %v31, %v35
    %v42 = vunpack.c.l.b16 %v27
    %v43 = vunpack.c.l.b16 %v28
    %v44 = vunpack.c.l.b16 %v29
    %v45 = vunpack.c.l.b16 %v30
    %v46 = vpack.c.b16 %v43, %v42
    %v47 = vpack.c.b16 %v45, %v44
    %vm50 = vcmask 261120
    %v52 = vsel %vm50, %v26, 0
    %54 = vmatprep.subr.bf16.mxu0 0
    %55 = vmatpush1.bf16.msra.mxu0 0
    %56 = vmatprep.subr.bf16.mxu0 0
    %57 = vmatpush1.bf16.msra.mxu0 0
    %58 = vmatprep.subr.bf16.mxu0 0
    %59 = vmatpush1.bf16.msra.mxu0 0
    %60 = vmatprep.subr.bf16.mxu0 0
    %61 = vmatpush1.bf16.msra.mxu0 0
    %62 = vmatprep.subr.bf16.mxu0 0
    %63 = vmatpush1.bf16.msra.mxu0 0
    %64 = vmatprep.subr.bf16.mxu0 0
    %65 = vmatpush1.bf16.msra.mxu0 0
    %66 = vmatprep.subr.bf16.mxu0 0
    %67 = vmatpush1.bf16.msra.mxu0 %v47
    %68 = vmatprep.subr.bf16.mxu0 0
    %69 = vmatpush1.bf16.msra.mxu0 %v46
    %70 = vmatprep.subr.bf16.mxu0 0
    %71 = vmatpush2.bf16.msra.mxu0 0
    %72 = vmatprep.subr.bf16.mxu0 0
    %73 = vmatpush2.bf16.msra.mxu0 0
    %74 = vmatprep.subr.bf16.mxu0 0
    %75 = vmatpush2.bf16.msra.mxu0 0
    %76 = vmatprep.subr.bf16.mxu0 0
    %77 = vmatpush2.bf16.msra.mxu0 0
    %78 = vmatprep.subr.bf16.mxu0 0
    %79 = vmatpush2.bf16.msra.mxu0 0
    %80 = vmatprep.subr.bf16.mxu0 0
    %81 = vmatpush2.bf16.msra.mxu0 0
    %82 = vmatprep.subr.bf16.mxu0 0
    %83 = vmatpush2.bf16.msra.mxu0 0
    %84 = vmatprep.subr.bf16.mxu0 0
    %85 = vmatpush2.bf16.msra.mxu0 0
    %86 = vmatprep.mubr.bf16.mxu0 0
    %87 = vmatmul.mubr.bf16.gmra.mxu0 %v52
    %v88 = vpop.f32.mrf.mxu0
    %v89 = vadd.f32 %v36, %v88
    %v90 = vpop.f32.mrf.mxu0
    %v91 = vpop.f32.mrf.mxu0
    %v92 = vpop.f32.mrf.mxu0
    %93 = vdwg.mxu0
    %v94 = vmax.f32 %v89, 0.0
    %v95 = vpack.c.bf16 %v94, %v94
    %v96 = vld [vmem:[%s3] sm:$0xf]
    %v97 = vld [vmem:[%s3 + $0x4] sm:$0xf]
    %v98 = vld [vmem:[%s3 + $0x8] sm:$0xf]
    %v99 = vld [vmem:[%s3 + $0xc] sm:$0xf]
    %v100 = vld [vmem:[%s3 + $0x10] sm:$0xf]
    %v101 = vld [vmem:[%s3 + $0x14] sm:$0xf]
    %v102 = vld [vmem:[%s3 + $0x18] sm:$0xf]
    %v103 = vld [vmem:[%s3 + $0x1c] sm:$0xf]
    %v104 = vld [vmem:[%s4] sm:$0x1]
    %v106 = vlaneseq
    %v107 = vshrl.u32 %v106, 7
    %v108 = vsub.s32 0, %v107
    %v109 = vrot.slane %v104, %v108
    %v119 = vunpack.c.l.b16 %v96
    %v120 = vunpack.c.l.b16 %v97
    %v121 = vunpack.c.l.b16 %v98
    %v122 = vunpack.c.l.b16 %v99
    %v123 = vunpack.c.l.b16 %v100
    %v124 = vunpack.c.l.b16 %v101
    %v125 = vunpack.c.l.b16 %v102
    %v126 = vunpack.c.l.b16 %v103
    %v127 = vpack.c.b16 %v120, %v119
    %v128 = vpack.c.b16 %v122, %v121
    %v129 = vpack.c.b16 %v124, %v123
    %v130 = vpack.c.b16 %v126, %v125
    %vm135 = vcmask 523264
    %v137 = vsel %vm135, %v95, 0
    %139 = vmatprep.subr.bf16.mxu0 0
    %140 = vmatpush1.bf16.msra.mxu0 0
    %141 = vmatprep.subr.bf16.mxu0 0
    %142 = vmatpush1.bf16.msra.mxu0 0
    %143 = vmatprep.subr.bf16.mxu0 0
    %144 = vmatpush1.bf16.msra.mxu0 0
    %145 = vmatprep.subr.bf16.mxu0 0
    %146 = vmatpush1.bf16.msra.mxu0 0
    %147 = vmatprep.subr.bf16.mxu0 0
    %148 = vmatpush1.bf16.msra.mxu0 %v130
    %149 = vmatprep.subr.bf16.mxu0 0
    %150 = vmatpush1.bf16.msra.mxu0 %v129
    %151 = vmatprep.subr.bf16.mxu0 0
    %152 = vmatpush1.bf16.msra.mxu0 %v128
    %153 = vmatprep.subr.bf16.mxu0 0
    %154 = vmatpush1.bf16.msra.mxu0 %v127
    %155 = vmatprep.subr.bf16.mxu0 0
    %156 = vmatpush2.bf16.msra.mxu0 0
    %157 = vmatprep.subr.bf16.mxu0 0
    %158 = vmatpush2.bf16.msra.mxu0 0
    %159 = vmatprep.subr.bf16.mxu0 0
    %160 = vmatpush2.bf16.msra.mxu0 0
    %161 = vmatprep.subr.bf16.mxu0 0
    %162 = vmatpush2.bf16.msra.mxu0 0
    %163 = vmatprep.subr.bf16.mxu0 0
    %164 = vmatpush2.bf16.msra.mxu0 0
    %165 = vmatprep.subr.bf16.mxu0 0
    %166 = vmatpush2.bf16.msra.mxu0 0
    %167 = vmatprep.subr.bf16.mxu0 0
    %168 = vmatpush2.bf16.msra.mxu0 0
    %169 = vmatprep.subr.bf16.mxu0 0
    %170 = vmatpush2.bf16.msra.mxu0 0
    %171 = vmatprep.mubr.bf16.mxu0 0
    %172 = vmatmul.mubr.bf16.gmra.mxu0 %v137
    %v173 = vpop.f32.mrf.mxu0
    %v174 = vadd.f32 %v109, %v173
    %v175 = vpop.f32.mrf.mxu0
    %v176 = vpop.f32.mrf.mxu0
    %v177 = vpop.f32.mrf.mxu0
    %178 = vdwg.mxu0
    %vm179 = vcmask 130048
    %180 = vst.msk [vmem:[#allocation2] sm:$0xff] %vm179, %v174
    %v181 = vmax.f32 %v174, 0.0
    %vm182 = vcmp.ne.f32.partialorder %v174, %v174
    %v183 = vadd.f32 %v174, 0.0
    %v184 = vand.u32 2147483647, %v174
    %v185 = vsub.f32 0.0, %v184
    %v186 = vmul.f32 %v185, 1.442695
    %v187 = vpow.pop %v186
    %v188 = vadd.f32 %v187, 1.0
    %v189 = vlog2.pop %v188
    %v190 = vmul.f32 %v189, 0.6931472
    %v191 = vmul.f32 -0.5, %v187
    %v192 = vadd.f32 %v191, 1.0
    %v193 = vmul.f32 %v192, %v187
    %v194 = vand.u32 2147483647, %v187
    %vm195 = vcmp.lt.f32.partialorder %v194, 0.0004427343
    %v196 = vsel %vm195, %v193, %v190
    %v197 = vadd.f32 %v181, %v196
    %v198 = vsel %vm182, %v183, %v197
    %v199 = vadd.f32 %v198, 0.01
    %201 = vrot.lane.b32.xlu0 %v199, 112
    %v202 = vpop.permute.xlu0 %201
    %204 = vst.msk [vmem:[#allocation4] sm:$0xff] %vm179, %v202
    // Predicated region
    $region22: #{encoder_forward.1} parent=1 // pred_check
      _
    $region23: #{encoder_forward.1} parent=1 // pred_check_branch
      %206 = sbr.rel (0) target = $region25
    $region24: #{encoder_forward.1} parent=1 // pred_region
      %s208 = ssub.s32 128, 128
      %209 = vsyncadd [#allocation3], %s208
      %s211 = sshll.u32 [#allocation2], 4
      %s212 = int_to_ptr.vmem [resolvable:$true] %s211
      %214 = dma.vmem_to_hbm [thread:$0]  %s212, 128, %s5, [#allocation3]
    $region25: #{encoder_forward.1} parent=1 // pred_fallthru
      _
    // Predicated region
    $region26: #{encoder_forward.1} parent=1 // pred_check
      _
    $region27: #{encoder_forward.1} parent=1 // pred_check_branch
      %216 = sbr.rel (0) target = $region29
    $region28: #{encoder_forward.1} parent=1 // pred_region
      %s218 = ssub.s32 128, 128
      %219 = vsyncadd [#allocation5], %s218
      %s221 = sshll.u32 [#allocation4], 4
      %s222 = int_to_ptr.vmem [resolvable:$true] %s221
      %224 = dma.vmem_to_hbm [thread:$0]  %s222, 128, %s6, [#allocation5]
    $region29: #{encoder_forward.1} parent=1 // pred_fallthru
      _
    // Predicated region
    $region30: #{encoder_forward.1} parent=1 // pred_check
      _
    $region31: #{encoder_forward.1} parent=1 // pred_check_branch
      %226 = sbr.rel (0) target = $region33
    $region32: #{encoder_forward.1} parent=1 // pred_region
      %227 = dma.done [#allocation3], 128
    $region33: #{encoder_forward.1} parent=1 // pred_fallthru
      _
    // Predicated region
    $region34: #{encoder_forward.1} parent=1 // pred_check
      _
    $region35: #{encoder_forward.1} parent=1 // pred_check_branch
      %229 = sbr.rel (0) target = $region37
    $region36: #{encoder_forward.1} parent=1 // pred_region
      %230 = dma.done [#allocation5], 128
    $region37: #{encoder_forward.1} parent=1 // pred_fallthru
      _
    %231 = vsyncpa [#allocation3], 1
    %232 = vsyncpa [#allocation5], 1

</llo_original>
